<compile_context>
chip_gen: v5e
topology: v5e:2x2
jax: 0.10.0
libtpu: 0.0.40
codegen_flags: <defaults>
</compile_context>

<pallas_src>
from functools import partial
from typing import List, Optional

import jax
import jax.numpy as jnp
from jax.experimental import pallas as pl
from jax.experimental.pallas import tpu as pltpu

LANE = 128


def _round_up(n: int, m: int) -> int:
    return ((n + m - 1) // m) * m


def _mlp_kernel(n_layers: int, use_bias: bool, has_dense: bool,
                compute_dtype, epilogue_dtype, *refs):
    """refs = (rep, [dense], W0a, [W0b], [b0], W1, [b1], ..., out).

    Weights are already (in, out), zero-padded to lane multiples and in
    compute_dtype, so every jnp.dot feeds the MXU directly (f32 accumulation).
    Bias add + ReLU run in epilogue_dtype on the VPU.
    """
    out_ref = refs[-1]
    if has_dense:
        rep_ref, dense_ref = refs[0], refs[1]
        param_refs = refs[2:-1]
    else:
        rep_ref = refs[0]
        param_refs = refs[1:-1]

    idx = 0
    # ---- layer 0: split matmul replaces the HBM concat of `dense` ----------
    if has_dense:
        w0a = param_refs[idx][...]; idx += 1            # (rep_pad,   d0_pad)
        w0b = param_refs[idx][...]; idx += 1            # (dense_pad, d0_pad)
        h = jnp.dot(rep_ref[...], w0a, preferred_element_type=jnp.float32)
        h = h + jnp.dot(dense_ref[...], w0b, preferred_element_type=jnp.float32)
    else:
        w0 = param_refs[idx][...]; idx += 1
        h = jnp.dot(rep_ref[...], w0, preferred_element_type=jnp.float32)
    h = h.astype(epilogue_dtype)
    if use_bias:
        h = h + param_refs[idx][...]; idx += 1           # bias already epilogue dtype

    # ---- remaining layers: ReLU (VPU, epilogue dtype) then matmul (MXU) -----
    for _ in range(1, n_layers):
        h = jnp.maximum(h, 0)
        w = param_refs[idx][...]; idx += 1
        h = jnp.dot(h.astype(compute_dtype), w,
                    preferred_element_type=jnp.float32).astype(epilogue_dtype)
        if use_bias:
            h = h + param_refs[idx][...]; idx += 1

    out_ref[...] = h.astype(out_ref.dtype)


def mlp_decoder_forward(representation: jax.Array,
                        params: List,                 # (W,) or (W, b) per layer, torch (out, in)
                        dense: Optional[jax.Array] = None,
                        use_bias: bool = True,
                        compute_dtype=jnp.bfloat16,   # MXU operand dtype (f32 opt-in)
                        epilogue_dtype=None,          # bias/ReLU dtype; f32 on v5e
                        block_m: Optional[int] = None) -> jax.Array:
    batch, rep_dim = representation.shape
    out_dtype = representation.dtype
    has_dense = dense is not None
    dense_dim = dense.shape[1] if has_dense else 0
    n_layers = len(params)
    if epilogue_dtype is None:
        epilogue_dtype = compute_dtype

    in0 = params[0][0].shape[1]
    if in0 != rep_dim + dense_dim:
        raise ValueError(
            f"params[0] expects in_dim={in0} but got rep_dim+dense_dim="
            f"{rep_dim + dense_dim}")

    comp_isz = jnp.dtype(compute_dtype).itemsize
    epi_isz = jnp.dtype(epilogue_dtype).itemsize
    out_isz = jnp.dtype(out_dtype).itemsize

    # ---- feature geometry (all lane-padded) ---------------------------------
    rep_pad = _round_up(rep_dim, LANE)
    dense_pad = _round_up(dense_dim, LANE) if has_dense else 0
    out_dims = [p[0].shape[0] for p in params]
    out_pads = [_round_up(d, LANE) for d in out_dims]
    k_pads = [rep_pad + dense_pad] + out_pads[:-1]

    weight_bytes = sum(k * o for k, o in zip(k_pads, out_pads)) * comp_isz
    bias_bytes = (sum(out_pads) * epi_isz) if use_bias else 0
    resident_bytes = weight_bytes + bias_bytes          # single-buffered

    # ---- VMEM budget: 75% of physical (96 MiB v5e/v6e, 48 MiB v7x) ----------
    try:
        vmem_cap = int(pltpu.get_tpu_info().vmem_capacity_bytes)
    except Exception:
        vmem_cap = 64 << 20
    vmem_budget = int(vmem_cap * 0.75)

    # ---- batch tile selection -----------------------------------------------
    if block_m is None:
        bm = min(512, _round_up(batch, 8))
        if batch >= 32:
            # >= 4 grid steps: both v7x TensorCores get work and the pipeline
            # has something to overlap; no effect on single-TC v5e/v6e.
            bm = min(bm, max(8, _round_up(-(-batch // 4), 8)))
        per_row = (rep_pad + dense_pad) * comp_isz * 2      # double-buffered inputs
        per_row += out_pads[-1] * out_isz * 2               # double-buffered output
        per_row += 2 * max(out_pads) * max(epi_isz, 4)      # f32-acc intermediate headroom
        avail = vmem_budget - resident_bytes
        if avail > 0 and per_row > 0:
            bm = min(bm, max(8, (avail // per_row) // 8 * 8))
        block_m = int(max(8, bm))
    batch_p = _round_up(batch, block_m)
    n_steps = batch_p // block_m

    # ---- input prep (pad batch + layer-0 K dims to lane multiples) ----------
    rep = representation.astype(compute_dtype)
    if (batch_p - batch) or (rep_pad - rep_dim):
        rep = jnp.pad(rep, ((0, batch_p - batch), (0, rep_pad - rep_dim)))
    dns = None
    if has_dense:
        dns = dense.astype(compute_dtype)
        if (batch_p - batch) or (dense_pad - dense_dim):
            dns = jnp.pad(dns, ((0, batch_p - batch), (0, dense_pad - dense_dim)))

    # ---- weight prep (layout plumbing stays outside the kernel) -------------
    flat_params = []
    prev_out_pad = None
    for li, p in enumerate(params):
        w = jnp.asarray(p[0])                       # torch layout (out, in)
        out_d, in_d = w.shape
        out_p = out_pads[li]
        wt = w.T.astype(compute_dtype)              # (in, out): MXU-ready
        if li == 0:
            if has_dense:
                w0a = jnp.pad(wt[:rep_dim, :],
                              ((0, rep_pad - rep_dim), (0, out_p - out_d)))
                w0b = jnp.pad(wt[rep_dim:, :],
                              ((0, dense_pad - dense_dim), (0, out_p - out_d)))
                flat_params += [w0a, w0b]
            else:
                flat_params.append(
                    jnp.pad(wt, ((0, rep_pad - rep_dim), (0, out_p - out_d))))
        else:
            in_p = prev_out_pad
            flat_params.append(
                jnp.pad(wt, ((0, in_p - in_d), (0, out_p - out_d))))
        if use_bias:
            b = jnp.asarray(p[1]).astype(epilogue_dtype).reshape(1, -1)
            flat_params.append(jnp.pad(b, ((0, 0), (0, out_p - out_d))))
        prev_out_pad = out_p

    out_dim = out_dims[-1]
    out_pad = out_pads[-1]

    # ---- specs ---------------------------------------------------------------
    def _spec(shape, index_map, buffers=None):
        if buffers is None:
            return pl.BlockSpec(shape, index_map)
        return pl.BlockSpec(shape, index_map, pipeline_mode=pl.Buffered(buffers))

    # deeper activation buffering only pays off for narrow MLPs with real grids
    act_buffers = 3 if (n_steps >= 4 and max(out_pads) <= 512) else None

    inputs = [rep]
    in_specs = [_spec((block_m, rep_pad), lambda i: (i, 0), act_buffers)]
    if has_dense:
        inputs.append(dns)
        in_specs.append(_spec((block_m, dense_pad), lambda i: (i, 0), act_buffers))
    for fp in flat_params:
        inputs.append(fp)
        # constant index_map -> DMA once; single buffer halves resident VMEM
        in_specs.append(_spec(fp.shape, lambda i: (0, 0), buffers=1))
    out_spec = pl.BlockSpec((block_m, out_pad), lambda i: (i, 0))   # lane-dense store

    # ---- explicit VMEM limit (20%+ headroom, capped at 75% physical) --------
    act_tile_bytes = block_m * (rep_pad + dense_pad) * comp_isz * (act_buffers or 2)
    out_tile_bytes = block_m * out_pad * out_isz * 2
    interm_bytes = 2 * block_m * max(out_pads) * max(epi_isz, 4)
    need = resident_bytes + act_tile_bytes + out_tile_bytes + interm_bytes
    vmem_limit = int(min(max(int(need * 1.25) + (1 << 20), 16 << 20), vmem_budget))

    # ---- cost estimate (advisory for XLA scheduling) -------------------------
    flops = 2 * batch_p * sum(k * o for k, o in zip(k_pads, out_pads))
    act_bytes = rep.size * comp_isz + (dns.size * comp_isz if has_dense else 0)
    out_bytes = batch_p * out_pad * out_isz
    cost = pl.CostEstimate(flops=int(flops), transcendentals=0,
                           bytes_accessed=int(resident_bytes + act_bytes + out_bytes))

    out = pl.pallas_call(
        partial(_mlp_kernel, n_layers, use_bias, has_dense,
                compute_dtype, epilogue_dtype),
        out_shape=jax.ShapeDtypeStruct((batch_p, out_pad), out_dtype),
        grid=(n_steps,),
        in_specs=in_specs,
        out_specs=out_spec,
        compiler_params=pltpu.CompilerParams(
            dimension_semantics=("parallel",),      # megacore split on v7x
            vmem_limit_bytes=vmem_limit),
        cost_estimate=cost,
    )(*inputs)

    if batch_p == batch and out_pad == out_dim:
        return out                                   # no padding -> no extra HBM pass
    return out[:batch, :out_dim]


def init_mlp_decoder_params(key, in_dim: int, out_dim: int, bias: bool,
                            hidden_dims: Optional[List[int]] = None):
    """Deterministic synthetic init matching the torch module's layer shapes."""
    params = []
    dims_in = in_dim
    layer_dims = list(hidden_dims or []) + [out_dim]
    for d in layer_dims:
        key, kw, kb = jax.random.split(key, 3)
        bound = 1.0 / jnp.sqrt(dims_in)
        w = jax.random.uniform(kw, (d, dims_in), jnp.float32, -bound, bound)
        if bias:
            b = jax.random.uniform(kb, (d,), jnp.float32, -bound, bound)
            params.append((w, b))
        else:
            params.append((w,))
        dims_in = d
    return params


def _reference_forward(representation, params, dense=None, use_bias=True):
    x = representation
    if dense is not None:
        x = jnp.concatenate([x, dense], axis=1)
    for i, p in enumerate(params):
        x = x @ p[0].T
        if use_bias:
            x = x + p[1]
        if i < len(params) - 1:
            x = jnp.maximum(x, 0.0)
    return x


if __name__ == "__main__":
    key = jax.random.PRNGKey(0)
    k_rep, k_dense, k_params = jax.random.split(key, 3)

    batch = 8
    rep_dim = 16
    dense_dim = 16
    in_dim = rep_dim + dense_dim          # after (logical) concat along axis 1
    hidden_dims = [32, 32]
    out_dim = 8
    use_bias = True

    representation = jax.random.normal(k_rep, (batch, rep_dim), jnp.float32)
    dense = jax.random.normal(k_dense, (batch, dense_dim), jnp.float32)
    params = init_mlp_decoder_params(k_params, in_dim, out_dim, use_bias, hidden_dims)

    ref = _reference_forward(representation, params, dense=dense, use_bias=use_bias)

    # f32 MXU path: matches the torch reference tightly.
    out_f32 = mlp_decoder_forward(representation, params, dense=dense,
                                  use_bias=use_bias,
                                  compute_dtype=jnp.float32)
    out_f32 = jax.block_until_ready(out_f32)
    assert out_f32.shape == (batch, out_dim)
    assert jnp.allclose(out_f32, ref, atol=1e-5, rtol=1e-5), "f32 mismatch vs reference"

    # Default perf path: bf16 MXU operands + f32 accumulation, bf16 epilogue.
    out_bf16 = mlp_decoder_forward(representation, params, dense=dense,
                                   use_bias=use_bias)
    out_bf16 = jax.block_until_ready(out_bf16)
    assert out_bf16.shape == (batch, out_dim)
    assert jnp.allclose(out_bf16, ref, atol=1e-1, rtol=1e-1), "bf16 mismatch vs reference"

    print("KERNEL_OK")
</pallas_src>

<mosaic_0001>
module attributes {stable_mosaic.version = 11 : i64} {
  func.func @_mlp_kernel(%arg0: i32, %arg1: memref<8x128xf32, #tpu.memory_space<vmem>>, %arg2: memref<8x128xf32, #tpu.memory_space<vmem>>, %arg3: memref<128x128xf32, #tpu.memory_space<vmem>>, %arg4: memref<128x128xf32, #tpu.memory_space<vmem>>, %arg5: memref<1x128xf32, #tpu.memory_space<vmem>>, %arg6: memref<128x128xf32, #tpu.memory_space<vmem>>, %arg7: memref<1x128xf32, #tpu.memory_space<vmem>>, %arg8: memref<128x128xf32, #tpu.memory_space<vmem>>, %arg9: memref<1x128xf32, #tpu.memory_space<vmem>>, %arg10: memref<8x128xf32, #tpu.memory_space<vmem>>) attributes {dimension_semantics = [#tpu.dimension_semantics<parallel>], iteration_bounds = array<i64: 1>, scalar_prefetch = 0 : i64, scratch_operands = 0 : i64, tpu.core_type = #tpu.core_type<tc>, window_params = [{transform_indices = @transform_0, window_bounds = array<i64: 8, 128>}, {transform_indices = @transform_1, window_bounds = array<i64: 8, 128>}, {pipeline_mode = #tpu.pipeline_mode<synchronous>, transform_indices = @transform_2, window_bounds = array<i64: 128, 128>}, {pipeline_mode = #tpu.pipeline_mode<synchronous>, transform_indices = @transform_3, window_bounds = array<i64: 128, 128>}, {pipeline_mode = #tpu.pipeline_mode<synchronous>, transform_indices = @transform_4, window_bounds = array<i64: 1, 128>}, {pipeline_mode = #tpu.pipeline_mode<synchronous>, transform_indices = @transform_5, window_bounds = array<i64: 128, 128>}, {pipeline_mode = #tpu.pipeline_mode<synchronous>, transform_indices = @transform_6, window_bounds = array<i64: 1, 128>}, {pipeline_mode = #tpu.pipeline_mode<synchronous>, transform_indices = @transform_7, window_bounds = array<i64: 128, 128>}, {pipeline_mode = #tpu.pipeline_mode<synchronous>, transform_indices = @transform_8, window_bounds = array<i64: 1, 128>}, {transform_indices = @transform_9, window_bounds = array<i64: 8, 128>}]} {
    %c0 = arith.constant 0 : index
    %c0_0 = arith.constant 0 : index
    %0 = vector.load %arg3[%c0, %c0_0] : memref<128x128xf32, #tpu.memory_space<vmem>>, vector<128x128xf32>
    %c0_1 = arith.constant 0 : index
    %c0_2 = arith.constant 0 : index
    %1 = vector.load %arg4[%c0_1, %c0_2] : memref<128x128xf32, #tpu.memory_space<vmem>>, vector<128x128xf32>
    %c0_3 = arith.constant 0 : index
    %c0_4 = arith.constant 0 : index
    %2 = vector.load %arg1[%c0_3, %c0_4] : memref<8x128xf32, #tpu.memory_space<vmem>>, vector<8x128xf32>
    %cst = arith.constant dense<0.000000e+00> : vector<8x128xf32>
    %3 = tpu.matmul %2, %0, %cst {dimension_numbers = #tpu.dot_dimension_numbers<[1], [0], [0], [1], [0, 0, 1, 1], [], []>} : vector<8x128xf32>, vector<128x128xf32>, vector<8x128xf32> -> vector<8x128xf32>
    %c0_5 = arith.constant 0 : index
    %c0_6 = arith.constant 0 : index
    %4 = vector.load %arg2[%c0_5, %c0_6] : memref<8x128xf32, #tpu.memory_space<vmem>>, vector<8x128xf32>
    %cst_7 = arith.constant dense<0.000000e+00> : vector<8x128xf32>
    %5 = tpu.matmul %4, %1, %cst_7 {dimension_numbers = #tpu.dot_dimension_numbers<[1], [0], [0], [1], [0, 0, 1, 1], [], []>} : vector<8x128xf32>, vector<128x128xf32>, vector<8x128xf32> -> vector<8x128xf32>
    %6 = arith.addf %3, %5 : vector<8x128xf32>
    %c0_8 = arith.constant 0 : index
    %c0_9 = arith.constant 0 : index
    %7 = vector.load %arg5[%c0_8, %c0_9] : memref<1x128xf32, #tpu.memory_space<vmem>>, vector<1x128xf32>
    %8 = vector.broadcast %7 : vector<1x128xf32> to vector<8x128xf32>
    %9 = arith.addf %6, %8 : vector<8x128xf32>
    %cst_10 = arith.constant 0.000000e+00 : f32
    %10 = vector.broadcast %cst_10 : f32 to vector<8x128xf32>
    %11 = arith.maximumf %9, %10 : vector<8x128xf32>
    %c0_11 = arith.constant 0 : index
    %c0_12 = arith.constant 0 : index
    %12 = vector.load %arg6[%c0_11, %c0_12] : memref<128x128xf32, #tpu.memory_space<vmem>>, vector<128x128xf32>
    %cst_13 = arith.constant dense<0.000000e+00> : vector<8x128xf32>
    %13 = tpu.matmul %11, %12, %cst_13 {dimension_numbers = #tpu.dot_dimension_numbers<[1], [0], [0], [1], [0, 0, 1, 1], [], []>} : vector<8x128xf32>, vector<128x128xf32>, vector<8x128xf32> -> vector<8x128xf32>
    %c0_14 = arith.constant 0 : index
    %c0_15 = arith.constant 0 : index
    %14 = vector.load %arg7[%c0_14, %c0_15] : memref<1x128xf32, #tpu.memory_space<vmem>>, vector<1x128xf32>
    %15 = vector.broadcast %14 : vector<1x128xf32> to vector<8x128xf32>
    %16 = arith.addf %13, %15 : vector<8x128xf32>
    %cst_16 = arith.constant 0.000000e+00 : f32
    %17 = vector.broadcast %cst_16 : f32 to vector<8x128xf32>
    %18 = arith.maximumf %16, %17 : vector<8x128xf32>
    %c0_17 = arith.constant 0 : index
    %c0_18 = arith.constant 0 : index
    %19 = vector.load %arg8[%c0_17, %c0_18] : memref<128x128xf32, #tpu.memory_space<vmem>>, vector<128x128xf32>
    %cst_19 = arith.constant dense<0.000000e+00> : vector<8x128xf32>
    %20 = tpu.matmul %18, %19, %cst_19 {dimension_numbers = #tpu.dot_dimension_numbers<[1], [0], [0], [1], [0, 0, 1, 1], [], []>} : vector<8x128xf32>, vector<128x128xf32>, vector<8x128xf32> -> vector<8x128xf32>
    %c0_20 = arith.constant 0 : index
    %c0_21 = arith.constant 0 : index
    %21 = vector.load %arg9[%c0_20, %c0_21] : memref<1x128xf32, #tpu.memory_space<vmem>>, vector<1x128xf32>
    %22 = vector.broadcast %21 : vector<1x128xf32> to vector<8x128xf32>
    %23 = arith.addf %20, %22 : vector<8x128xf32>
    %c0_22 = arith.constant 0 : index
    %c0_23 = arith.constant 0 : index
    %24 = vector.load %arg10[%c0_22, %c0_23] : memref<8x128xf32, #tpu.memory_space<vmem>>, vector<8x128xf32>
    tpu.vector_store %arg10[%c0_22, %c0_23], %23 {strides = array<i32>} : memref<8x128xf32, #tpu.memory_space<vmem>>, vector<8x128xf32>,
    return
  }
  func.func @transform_0(%arg0: i32) -> (i32, i32) {
    %c0_i32 = arith.constant 0 : i32
    %c0_i32_0 = arith.constant 0 : i32
    return %arg0, %c0_i32 : i32, i32
  }
  func.func @transform_1(%arg0: i32) -> (i32, i32) {
    %c0_i32 = arith.constant 0 : i32
    %c0_i32_0 = arith.constant 0 : i32
    return %arg0, %c0_i32 : i32, i32
  }
  func.func @transform_2(%arg0: i32) -> (i32, i32) {
    %c0_i32 = arith.constant 0 : i32
    %c0_i32_0 = arith.constant 0 : i32
    %c0_i32_1 = arith.constant 0 : i32
    return %c0_i32, %c0_i32_0 : i32, i32
  }
  func.func @transform_3(%arg0: i32) -> (i32, i32) {
    %c0_i32 = arith.constant 0 : i32
    %c0_i32_0 = arith.constant 0 : i32
    %c0_i32_1 = arith.constant 0 : i32
    return %c0_i32, %c0_i32_0 : i32, i32
  }
  func.func @transform_4(%arg0: i32) -> (i32, i32) {
    %c0_i32 = arith.constant 0 : i32
    %c0_i32_0 = arith.constant 0 : i32
    %c0_i32_1 = arith.constant 0 : i32
    return %c0_i32, %c0_i32_0 : i32, i32
  }
  func.func @transform_5(%arg0: i32) -> (i32, i32) {
    %c0_i32 = arith.constant 0 : i32
    %c0_i32_0 = arith.constant 0 : i32
    %c0_i32_1 = arith.constant 0 : i32
    return %c0_i32, %c0_i32_0 : i32, i32
  }
  func.func @transform_6(%arg0: i32) -> (i32, i32) {
    %c0_i32 = arith.constant 0 : i32
    %c0_i32_0 = arith.constant 0 : i32
    %c0_i32_1 = arith.constant 0 : i32
    return %c0_i32, %c0_i32_0 : i32, i32
  }
  func.func @transform_7(%arg0: i32) -> (i32, i32) {
    %c0_i32 = arith.constant 0 : i32
    %c0_i32_0 = arith.constant 0 : i32
    %c0_i32_1 = arith.constant 0 : i32
    return %c0_i32, %c0_i32_0 : i32, i32
  }
  func.func @transform_8(%arg0: i32) -> (i32, i32) {
    %c0_i32 = arith.constant 0 : i32
    %c0_i32_0 = arith.constant 0 : i32
    %c0_i32_1 = arith.constant 0 : i32
    return %c0_i32, %c0_i32_0 : i32, i32
  }
  func.func @transform_9(%arg0: i32) -> (i32, i32) {
    %c0_i32 = arith.constant 0 : i32
    %c0_i32_0 = arith.constant 0 : i32
    return %arg0, %c0_i32 : i32, i32
  }
}

</mosaic_0001>

<llo_original>
// kernel: tpu_custom_call.1
$region0: #{tpu_custom_call.1}
  #allocation0 [shape = 'u32[]', space=smem, size = 0x4, offset = 0x4, fixed_abs, tag = 'smem constant byte address 0x4 - core index']
  #allocation1 [shape = 'u32[72,128]{1,0:T(1,128)}', space=vmem, size = 0x9000, scoped, tag = 'internal scratch']
  %s0 = inlined_call_operand.hbm [shape: f32[8,128], index: 0, kind: input, shape index: {}]
  %s1 = inlined_call_operand.hbm [shape: f32[8,128], index: 1, kind: input, shape index: {}]
  %s2 = inlined_call_operand.hbm [shape: f32[128,128], index: 2, kind: input, shape index: {}]
  %s3 = inlined_call_operand.hbm [shape: f32[128,128], index: 3, kind: input, shape index: {}]
  %s4 = inlined_call_operand.vmem [shape: f32[1,128], index: 4, kind: input, shape index: {}]
  %s5 = inlined_call_operand.hbm [shape: f32[128,128], index: 5, kind: input, shape index: {}]
  %s6 = inlined_call_operand.vmem [shape: f32[1,128], index: 6, kind: input, shape index: {}]
  %s7 = inlined_call_operand.hbm [shape: f32[128,128], index: 7, kind: input, shape index: {}]
  %s8 = inlined_call_operand.vmem [shape: f32[1,128], index: 8, kind: input, shape index: {}]
  %s9 = inlined_call_operand.hbm [shape: f32[8,128], index: 9, kind: output, shape index: {}]
  %s10 = sld [smem:[#allocation0]]
  $region70: #{tpu_custom_call.1} parent=0
    _
  %s12 = ssub.s32 1, %s10
  %s13 = scalar_select 0, %s12, %s10
  $region1: #{tpu_custom_call.1} parent=0
    #allocation2 [shape = 'u8[4096]{0}', space=vmem, size = 0x1000, scoped, tag = 'input window, operand 0, single buffered']
    #allocation3 [shape = 's32[1]{0}', space=sflag, size = 0x4, scoped, tag = 'scoped memory for tpu_custom_call.1']
    #allocation4 [shape = 's32[1]{0}', space=sflag, size = 0x4, scoped, tag = 'scoped memory for tpu_custom_call.1']
    #allocation5 [shape = 'u8[4096]{0}', space=vmem, size = 0x1000, scoped, tag = 'input window, operand 1, single buffered']
    #allocation6 [shape = 's32[1]{0}', space=sflag, size = 0x4, scoped, tag = 'scoped memory for tpu_custom_call.1']
    #allocation7 [shape = 'u8[65536]{0}', space=vmem, size = 0x10000, scoped, tag = 'input window, operand 2, single buffered']
    #allocation8 [shape = 'u8[65536]{0}', space=vmem, size = 0x10000, scoped, tag = 'input window, operand 3, single buffered']
    #allocation9 [shape = 's32[1]{0}', space=sflag, size = 0x4, scoped, tag = 'scoped memory for tpu_custom_call.1']
    #allocation10 [shape = 'u8[65536]{0}', space=vmem, size = 0x10000, scoped, tag = 'input window, operand 5, single buffered']
    #allocation11 [shape = 'u8[65536]{0}', space=vmem, size = 0x10000, scoped, tag = 'input window, operand 7, single buffered']
    #allocation12 [shape = 's32[1]{0}', space=sflag, size = 0x4, scoped, tag = 'scoped memory for tpu_custom_call.1']
    #allocation13 [shape = 'u8[4096]{0}', space=vmem, size = 0x1000, scoped, tag = 'output window, operand 0, single buffered']
    %14 = vsyncpa [#allocation3], 0
    %15 = vsyncpa [#allocation6], 0
    %16 = vsyncpa [#allocation9], 0
    %17 = vsyncpa [#allocation12], 0
    %18 = vsyncpa [#allocation4], 0
    // Predicated region
    $region2: #{tpu_custom_call.1} parent=1 // pred_check
      _
    $region3: #{tpu_custom_call.1} parent=1 // pred_check_branch
      %20 = sbr.rel (0) target = $region5
    $region4: #{tpu_custom_call.1} parent=1 // pred_region
      %22 = vsyncadd [#allocation3], 0
      %s24 = sshll.u32 %s0, 4
      %s25 = int_to_ptr.hbm [resolvable:$true] %s24
      %s26 = sshll.u32 [#allocation2], 4
      %s27 = int_to_ptr.vmem [resolvable:$true] %s26
      %29 = dma.hbm_to_vmem [thread:$0]  %s25, 128, %s27, [#allocation3]
    $region5: #{tpu_custom_call.1} parent=1 // pred_fallthru
      _
    // Predicated region
    $region6: #{tpu_custom_call.1} parent=1 // pred_check
      _
    $region7: #{tpu_custom_call.1} parent=1 // pred_check_branch
      %31 = sbr.rel (0) target = $region9
    $region8: #{tpu_custom_call.1} parent=1 // pred_region
      %33 = vsyncadd [#allocation6], 0
      %s35 = sshll.u32 %s1, 4
      %s36 = int_to_ptr.hbm [resolvable:$true] %s35
      %s37 = sshll.u32 [#allocation5], 4
      %s38 = int_to_ptr.vmem [resolvable:$true] %s37
      %40 = dma.hbm_to_vmem [thread:$0]  %s36, 128, %s38, [#allocation6]
    $region9: #{tpu_custom_call.1} parent=1 // pred_fallthru
      _
    // Predicated region
    $region10: #{tpu_custom_call.1} parent=1 // pred_check
      _
    $region11: #{tpu_custom_call.1} parent=1 // pred_check_branch
      %42 = sbr.rel (0) target = $region13
    $region12: #{tpu_custom_call.1} parent=1 // pred_region
      %44 = vsyncadd [#allocation6], 0
      %s45 = sshll.u32 %s2, 4
      %s46 = int_to_ptr.hbm [resolvable:$true] %s45
      %s47 = sshll.u32 [#allocation7], 4
      %s48 = int_to_ptr.vmem [resolvable:$true] %s47
      %53 = dma.hbm_to_vmem [thread:$0]  %s46, 2048, %s48, [#allocation6], 128, 128, 8
    $region13: #{tpu_custom_call.1} parent=1 // pred_fallthru
      _
    // Predicated region
    $region14: #{tpu_custom_call.1} parent=1 // pred_check
      _
    $region15: #{tpu_custom_call.1} parent=1 // pred_check_branch
      %55 = sbr.rel (0) target = $region17
    $region16: #{tpu_custom_call.1} parent=1 // pred_region
      %57 = vsyncadd [#allocation9], 0
      %s58 = sshll.u32 %s3, 4
      %s59 = int_to_ptr.hbm [resolvable:$true] %s58
      %s60 = sshll.u32 [#allocation8], 4
      %s61 = int_to_ptr.vmem [resolvable:$true] %s60
      %66 = dma.hbm_to_vmem [thread:$0]  %s59, 2048, %s61, [#allocation9], 128, 128, 8
    $region17: #{tpu_custom_call.1} parent=1 // pred_fallthru
      _
    // Predicated region
    $region18: #{tpu_custom_call.1} parent=1 // pred_check
      _
    $region19: #{tpu_custom_call.1} parent=1 // pred_check_branch
      %68 = sbr.rel (0) target = $region21
    $region20: #{tpu_custom_call.1} parent=1 // pred_region
      _
    $region21: #{tpu_custom_call.1} parent=1 // pred_fallthru
      _
    // Predicated region
    $region22: #{tpu_custom_call.1} parent=1 // pred_check
      _
    $region23: #{tpu_custom_call.1} parent=1 // pred_check_branch
      %70 = sbr.rel (0) target = $region25
    $region24: #{tpu_custom_call.1} parent=1 // pred_region
      %72 = vsyncadd [#allocation9], 0
      %s73 = sshll.u32 %s5, 4
      %s74 = int_to_ptr.hbm [resolvable:$true] %s73
      %s75 = sshll.u32 [#allocation10], 4
      %s76 = int_to_ptr.vmem [resolvable:$true] %s75
      %81 = dma.hbm_to_vmem [thread:$0]  %s74, 2048, %s76, [#allocation9], 128, 128, 8
    $region25: #{tpu_custom_call.1} parent=1 // pred_fallthru
      _
    // Predicated region
    $region26: #{tpu_custom_call.1} parent=1 // pred_check
      _
    $region27: #{tpu_custom_call.1} parent=1 // pred_check_branch
      %83 = sbr.rel (0) target = $region29
    $region28: #{tpu_custom_call.1} parent=1 // pred_region
      _
    $region29: #{tpu_custom_call.1} parent=1 // pred_fallthru
      _
    // Predicated region
    $region30: #{tpu_custom_call.1} parent=1 // pred_check
      _
    $region31: #{tpu_custom_call.1} parent=1 // pred_check_branch
      %85 = sbr.rel (0) target = $region33
    $region32: #{tpu_custom_call.1} parent=1 // pred_region
      %87 = vsyncadd [#allocation12], 0
      %s88 = sshll.u32 %s7, 4
      %s89 = int_to_ptr.hbm [resolvable:$true] %s88
      %s90 = sshll.u32 [#allocation11], 4
      %s91 = int_to_ptr.vmem [resolvable:$true] %s90
      %96 = dma.hbm_to_vmem [thread:$0]  %s89, 2048, %s91, [#allocation12], 128, 128, 8
    $region33: #{tpu_custom_call.1} parent=1 // pred_fallthru
      _
    // Predicated region
    $region34: #{tpu_custom_call.1} parent=1 // pred_check
      _
    $region35: #{tpu_custom_call.1} parent=1 // pred_check_branch
      %98 = sbr.rel (0) target = $region37
    $region36: #{tpu_custom_call.1} parent=1 // pred_region
      _
    $region37: #{tpu_custom_call.1} parent=1 // pred_fallthru
      _
    // Predicated region
    $region38: #{tpu_custom_call.1} parent=1 // pred_check
      _
    $region39: #{tpu_custom_call.1} parent=1 // pred_check_branch
      %100 = sbr.rel (0) target = $region41
    $region40: #{tpu_custom_call.1} parent=1 // pred_region
      %102 = dma.done [#allocation3], 128
    $region41: #{tpu_custom_call.1} parent=1 // pred_fallthru
      _
    // Predicated region
    $region42: #{tpu_custom_call.1} parent=1 // pred_check
      _
    $region43: #{tpu_custom_call.1} parent=1 // pred_check_branch
      %104 = sbr.rel (0) target = $region45
    $region44: #{tpu_custom_call.1} parent=1 // pred_region
      %106 = dma.done [#allocation6], 128
    $region45: #{tpu_custom_call.1} parent=1 // pred_fallthru
      _
    // Predicated region
    $region46: #{tpu_custom_call.1} parent=1 // pred_check
      _
    $region47: #{tpu_custom_call.1} parent=1 // pred_check_branch
      %108 = sbr.rel (0) target = $region49
    $region48: #{tpu_custom_call.1} parent=1 // pred_region
      %110 = dma.done [#allocation6], 2048
    $region49: #{tpu_custom_call.1} parent=1 // pred_fallthru
      _
    // Predicated region
    $region50: #{tpu_custom_call.1} parent=1 // pred_check
      _
    $region51: #{tpu_custom_call.1} parent=1 // pred_check_branch
      %112 = sbr.rel (0) target = $region53
    $region52: #{tpu_custom_call.1} parent=1 // pred_region
      %114 = dma.done [#allocation9], 2048
    $region53: #{tpu_custom_call.1} parent=1 // pred_fallthru
      _
    // Predicated region
    $region54: #{tpu_custom_call.1} parent=1 // pred_check
      _
    $region55: #{tpu_custom_call.1} parent=1 // pred_check_branch
      %116 = sbr.rel (0) target = $region57
    $region56: #{tpu_custom_call.1} parent=1 // pred_region
      %118 = dma.done [#allocation9], 2048
    $region57: #{tpu_custom_call.1} parent=1 // pred_fallthru
      _
    // Predicated region
    $region58: #{tpu_custom_call.1} parent=1 // pred_check
      _
    $region59: #{tpu_custom_call.1} parent=1 // pred_check_branch
      %120 = sbr.rel (0) target = $region61
    $region60: #{tpu_custom_call.1} parent=1 // pred_region
      %122 = dma.done [#allocation12], 2048
    $region61: #{tpu_custom_call.1} parent=1 // pred_fallthru
      _
    %v123 = vld [vmem:[#allocation7] sm:$0xff]
    %v124 = vld [vmem:[#allocation7 + $0x8] sm:$0xff]
    %v125 = vld [vmem:[#allocation7 + $0x10] sm:$0xff]
    %v126 = vld [vmem:[#allocation7 + $0x18] sm:$0xff]
    %v127 = vld [vmem:[#allocation7 + $0x20] sm:$0xff]
    %v128 = vld [vmem:[#allocation7 + $0x28] sm:$0xff]
    %v129 = vld [vmem:[#allocation7 + $0x30] sm:$0xff]
    %v130 = vld [vmem:[#allocation7 + $0x38] sm:$0xff]
    %v131 = vld [vmem:[#allocation7 + $0x40] sm:$0xff]
    %v132 = vld [vmem:[#allocation7 + $0x48] sm:$0xff]
    %v133 = vld [vmem:[#allocation7 + $0x50] sm:$0xff]
    %v134 = vld [vmem:[#allocation7 + $0x58] sm:$0xff]
    %v135 = vld [vmem:[#allocation7 + $0x60] sm:$0xff]
    %v136 = vld [vmem:[#allocation7 + $0x68] sm:$0xff]
    %v137 = vld [vmem:[#allocation7 + $0x70] sm:$0xff]
    %v138 = vld [vmem:[#allocation7 + $0x78] sm:$0xff]
    %v139 = vld [vmem:[#allocation8] sm:$0xff]
    %v140 = vld [vmem:[#allocation8 + $0x8] sm:$0xff]
    %v141 = vld [vmem:[#allocation8 + $0x10] sm:$0xff]
    %v142 = vld [vmem:[#allocation8 + $0x18] sm:$0xff]
    %v143 = vld [vmem:[#allocation8 + $0x20] sm:$0xff]
    %v144 = vld [vmem:[#allocation8 + $0x28] sm:$0xff]
    %v145 = vld [vmem:[#allocation8 + $0x30] sm:$0xff]
    %v146 = vld [vmem:[#allocation8 + $0x38] sm:$0xff]
    %v147 = vld [vmem:[#allocation8 + $0x40] sm:$0xff]
    %v148 = vld [vmem:[#allocation8 + $0x48] sm:$0xff]
    %v149 = vld [vmem:[#allocation8 + $0x50] sm:$0xff]
    %v150 = vld [vmem:[#allocation8 + $0x58] sm:$0xff]
    %v151 = vld [vmem:[#allocation8 + $0x60] sm:$0xff]
    %v152 = vld [vmem:[#allocation8 + $0x68] sm:$0xff]
    %v153 = vld [vmem:[#allocation8 + $0x70] sm:$0xff]
    %v154 = vld [vmem:[#allocation8 + $0x78] sm:$0xff]
    %v155 = vld [vmem:[#allocation2] sm:$0xff]
    %v156 = vld [vmem:[#allocation5] sm:$0xff]
    %157 = vmatpush.msra.mxu0 %v154
    %158 = vmatpush.msra.mxu0 %v153
    %159 = vmatpush.msra.mxu0 %v152
    %160 = vmatpush.msra.mxu0 %v151
    %161 = vmatpush.msra.mxu0 %v150
    %162 = vmatpush.msra.mxu0 %v149
    %163 = vmatpush.msra.mxu0 %v148
    %164 = vmatpush.msra.mxu0 %v147
    %165 = vmatpush.msra.mxu0 %v146
    %166 = vmatpush.msra.mxu0 %v145
    %167 = vmatpush.msra.mxu0 %v144
    %168 = vmatpush.msra.mxu0 %v143
    %169 = vmatpush.msra.mxu0 %v142
    %170 = vmatpush.msra.mxu0 %v141
    %171 = vmatpush.msra.mxu0 %v140
    %172 = vmatpush.msra.mxu0 %v139
    %173 = vmatmul.f32.gmra.mxu0 %v156
    %v174 = vpop.f32.mrf.mxu0
    %v175 = vadd.f32 0.0, %v174
    %176 = vdwg.mxu0
    %177 = vmatpush.msra.mxu0 %v138
    %178 = vmatpush.msra.mxu0 %v137
    %179 = vmatpush.msra.mxu0 %v136
    %180 = vmatpush.msra.mxu0 %v135
    %181 = vmatpush.msra.mxu0 %v134
    %182 = vmatpush.msra.mxu0 %v133
    %183 = vmatpush.msra.mxu0 %v132
    %184 = vmatpush.msra.mxu0 %v131
    %185 = vmatpush.msra.mxu0 %v130
    %186 = vmatpush.msra.mxu0 %v129
    %187 = vmatpush.msra.mxu0 %v128
    %188 = vmatpush.msra.mxu0 %v127
    %189 = vmatpush.msra.mxu0 %v126
    %190 = vmatpush.msra.mxu0 %v125
    %191 = vmatpush.msra.mxu0 %v124
    %192 = vmatpush.msra.mxu0 %v123
    %193 = vmatmul.f32.gmra.mxu0 %v155
    %v194 = vpop.f32.mrf.mxu0
    %v195 = vadd.f32 %v175, %v194
    %196 = vdwg.mxu0
    %v197 = vld [vmem:[%s4] sm:$0x1]
    %v199 = vperm.slane %v197, 0
    %v201 = vadd.f32 %v195, %v199
    %v202 = vmax.f32 %v201, 0.0
    %v203 = vld [vmem:[#allocation10] sm:$0xff]
    %v204 = vld [vmem:[#allocation10 + $0x8] sm:$0xff]
    %v205 = vld [vmem:[#allocation10 + $0x10] sm:$0xff]
    %v206 = vld [vmem:[#allocation10 + $0x18] sm:$0xff]
    %v207 = vld [vmem:[#allocation10 + $0x20] sm:$0xff]
    %v208 = vld [vmem:[#allocation10 + $0x28] sm:$0xff]
    %v209 = vld [vmem:[#allocation10 + $0x30] sm:$0xff]
    %v210 = vld [vmem:[#allocation10 + $0x38] sm:$0xff]
    %v211 = vld [vmem:[#allocation10 + $0x40] sm:$0xff]
    %v212 = vld [vmem:[#allocation10 + $0x48] sm:$0xff]
    %v213 = vld [vmem:[#allocation10 + $0x50] sm:$0xff]
    %v214 = vld [vmem:[#allocation10 + $0x58] sm:$0xff]
    %v215 = vld [vmem:[#allocation10 + $0x60] sm:$0xff]
    %v216 = vld [vmem:[#allocation10 + $0x68] sm:$0xff]
    %v217 = vld [vmem:[#allocation10 + $0x70] sm:$0xff]
    %v218 = vld [vmem:[#allocation10 + $0x78] sm:$0xff]
    %v219 = vld [vmem:[%s6] sm:$0x1]
    %v221 = vperm.slane %v219, 0
    %223 = vmatpush.msra.mxu0 %v218
    %224 = vmatpush.msra.mxu0 %v217
    %225 = vmatpush.msra.mxu0 %v216
    %226 = vmatpush.msra.mxu0 %v215
    %227 = vmatpush.msra.mxu0 %v214
    %228 = vmatpush.msra.mxu0 %v213
    %229 = vmatpush.msra.mxu0 %v212
    %230 = vmatpush.msra.mxu0 %v211
    %231 = vmatpush.msra.mxu0 %v210
    %232 = vmatpush.msra.mxu0 %v209
    %233 = vmatpush.msra.mxu0 %v208
    %234 = vmatpush.msra.mxu0 %v207
    %235 = vmatpush.msra.mxu0 %v206
    %236 = vmatpush.msra.mxu0 %v205
    %237 = vmatpush.msra.mxu0 %v204
    %238 = vmatpush.msra.mxu0 %v203
    %239 = vmatmul.f32.gmra.mxu0 %v202
    %v240 = vpop.f32.mrf.mxu0
    %v241 = vadd.f32 %v221, %v240
    %242 = vdwg.mxu0
    %v243 = vmax.f32 %v241, 0.0
    %v244 = vld [vmem:[#allocation11] sm:$0xff]
    %v245 = vld [vmem:[#allocation11 + $0x8] sm:$0xff]
    %v246 = vld [vmem:[#allocation11 + $0x10] sm:$0xff]
    %v247 = vld [vmem:[#allocation11 + $0x18] sm:$0xff]
    %v248 = vld [vmem:[#allocation11 + $0x20] sm:$0xff]
    %v249 = vld [vmem:[#allocation11 + $0x28] sm:$0xff]
    %v250 = vld [vmem:[#allocation11 + $0x30] sm:$0xff]
    %v251 = vld [vmem:[#allocation11 + $0x38] sm:$0xff]
    %v252 = vld [vmem:[#allocation11 + $0x40] sm:$0xff]
    %v253 = vld [vmem:[#allocation11 + $0x48] sm:$0xff]
    %v254 = vld [vmem:[#allocation11 + $0x50] sm:$0xff]
    %v255 = vld [vmem:[#allocation11 + $0x58] sm:$0xff]
    %v256 = vld [vmem:[#allocation11 + $0x60] sm:$0xff]
    %v257 = vld [vmem:[#allocation11 + $0x68] sm:$0xff]
    %v258 = vld [vmem:[#allocation11 + $0x70] sm:$0xff]
    %v259 = vld [vmem:[#allocation11 + $0x78] sm:$0xff]
    %v260 = vld [vmem:[%s8] sm:$0x1]
    %v262 = vperm.slane %v260, 0
    %264 = vmatpush.msra.mxu0 %v259
    %265 = vmatpush.msra.mxu0 %v258
    %266 = vmatpush.msra.mxu0 %v257
    %267 = vmatpush.msra.mxu0 %v256
    %268 = vmatpush.msra.mxu0 %v255
    %269 = vmatpush.msra.mxu0 %v254
    %270 = vmatpush.msra.mxu0 %v253
    %271 = vmatpush.msra.mxu0 %v252
    %272 = vmatpush.msra.mxu0 %v251
    %273 = vmatpush.msra.mxu0 %v250
    %274 = vmatpush.msra.mxu0 %v249
    %275 = vmatpush.msra.mxu0 %v248
    %276 = vmatpush.msra.mxu0 %v247
    %277 = vmatpush.msra.mxu0 %v246
    %278 = vmatpush.msra.mxu0 %v245
    %279 = vmatpush.msra.mxu0 %v244
    %280 = vmatmul.f32.gmra.mxu0 %v243
    %v281 = vpop.f32.mrf.mxu0
    %v282 = vadd.f32 %v262, %v281
    %283 = vdwg.mxu0
    %284 = vst [vmem:[#allocation13] sm:$0xff] %v282
    // Predicated region
    $region62: #{tpu_custom_call.1} parent=1 // pred_check
      _
    $region63: #{tpu_custom_call.1} parent=1 // pred_check_branch
      %286 = sbr.rel (0) target = $region65
    $region64: #{tpu_custom_call.1} parent=1 // pred_region
      %288 = vsyncadd [#allocation4], 0
      %s290 = sshll.u32 [#allocation13], 4
      %s291 = int_to_ptr.vmem [resolvable:$true] %s290
      %s292 = sshll.u32 %s9, 4
      %s293 = int_to_ptr.hbm [resolvable:$true] %s292
      %295 = dma.vmem_to_hbm [thread:$0]  %s291, 128, %s293, [#allocation4]
    $region65: #{tpu_custom_call.1} parent=1 // pred_fallthru
      _
    // Predicated region
    $region66: #{tpu_custom_call.1} parent=1 // pred_check
      _
    $region67: #{tpu_custom_call.1} parent=1 // pred_check_branch
      %297 = sbr.rel (0) target = $region69
    $region68: #{tpu_custom_call.1} parent=1 // pred_region
      %299 = dma.done [#allocation4], 128
    $region69: #{tpu_custom_call.1} parent=1 // pred_fallthru
      _
    %300 = vsyncpa [#allocation3], 1
    %301 = vsyncpa [#allocation6], 1
    %302 = vsyncpa [#allocation9], 1
    %303 = vsyncpa [#allocation12], 1
    %304 = vsyncpa [#allocation4], 1

</llo_original>
